<compile_context>
chip_gen: v7x
topology: tpu7x:2x2x1
jax: 0.10.0
libtpu: 0.0.40
codegen_flags: <defaults>
</compile_context>

<pallas_src>
import functools

import jax
import jax.numpy as jnp
from jax.experimental import pallas as pl
from jax.experimental.pallas import tpu as pltpu


def _round_up(v, m):
    return (v + m - 1) // m * m


def _pad2(a, rows, cols):
    """Zero-pad a 2-D array up to (rows, cols). No-op when already aligned."""
    pr, pc = rows - a.shape[0], cols - a.shape[1]
    if pr == 0 and pc == 0:
        return a
    return jnp.pad(a, ((0, pr), (0, pc)))


def _ff_kernel(*refs, is_gated, use_layernorm, eps, mxu_dtype,
               needs_xn, use_acc, num_k):
    """One (row-tile, hidden-tile) grid step of the fused FeedForward.

    Ref order: x, [ln_gamma, ln_beta]?, w1, b1, [w_v, b_v]?, w2, b2, out,
               [xn_scratch]?, [acc_scratch]?
    """
    refs = list(refs)
    acc_ref = refs.pop() if use_acc else None     # (tm, O_p) f32 accumulator
    xn_ref = refs.pop() if needs_xn else None     # (tm, d_in) normed/cast acts
    o_ref = refs.pop()                            # (tm, O_p) output tile

    x_ref = refs[0]
    i = 1
    if use_layernorm:
        ln_g_ref, ln_b_ref = refs[i], refs[i + 1]
        i += 2
    w1_ref, b1_ref = refs[i], refs[i + 1]
    i += 2
    if is_gated:
        wv_ref, bv_ref = refs[i], refs[i + 1]
        i += 2
    w2_ref, b2_ref = refs[i], refs[i + 1]

    k = pl.program_id(1)

    def activations():
        # LayerNorm (biased variance, PyTorch semantics) + cast to MXU dtype.
        xf = x_ref[...].astype(jnp.float32)
        if use_layernorm:
            mean = jnp.mean(xf, axis=-1, keepdims=True)
            var = jnp.mean((xf - mean) ** 2, axis=-1, keepdims=True)
            xf = (xf - mean) * jax.lax.rsqrt(var + eps)
            xf = (xf * ln_g_ref[...].astype(jnp.float32)
                  + ln_b_ref[...].astype(jnp.float32))
        return xf.astype(mxu_dtype)

    if needs_xn:
        # Hidden reduction has >1 step: compute once per row tile into scratch.
        @pl.when(k == 0)
        def _xn():
            xn_ref[...] = activations()
        xn = xn_ref[...]
    elif use_layernorm or x_ref.dtype != mxu_dtype:
        xn = activations()           # single hidden step: inline, no scratch
    else:
        xn = x_ref[...]              # feed x straight to the MXU, no copy

    h = jnp.dot(xn, w1_ref[...], preferred_element_type=jnp.float32)
    h = jnp.maximum(h + b1_ref[...].astype(jnp.float32), 0.0)       # ReLU (VPU)
    if is_gated:
        v = jnp.dot(xn, wv_ref[...], preferred_element_type=jnp.float32)
        h = h * (v + bv_ref[...].astype(jnp.float32))
    # TODO(synk): nn.Dropout is identity here (eval/inference semantics); no RNG mask.
    part = jnp.dot(h.astype(mxu_dtype), w2_ref[...],
                   preferred_element_type=jnp.float32)

    if num_k == 1:
        # Weights fully resident: single shot, no accumulator at all.
        o_ref[...] = (part + b2_ref[...].astype(jnp.float32)).astype(o_ref.dtype)
    elif use_acc:
        @pl.when(k == 0)
        def _init():
            acc_ref[...] = jnp.zeros_like(acc_ref)
        acc_ref[...] += part

        @pl.when(k == num_k - 1)
        def _fin():
            o_ref[...] = (acc_ref[...]
                          + b2_ref[...].astype(jnp.float32)).astype(o_ref.dtype)
    else:
        # float32 output: accumulate directly into the resident output tile.
        @pl.when(k == 0)
        def _init():
            o_ref[...] = jnp.zeros_like(o_ref)
        o_ref[...] += part

        @pl.when(k == num_k - 1)
        def _fin():
            o_ref[...] += b2_ref[...].astype(jnp.float32)


def feed_forward(x, params, *, is_gated=False, use_layernorm=False, eps=1e-5,
                 tile_rows=512, tile_hidden=None):
    """x: (N, d_in). params: dict of weights (see header). Returns (N, d_out)."""
    N, d_in = x.shape
    d_hidden = params["w1"].shape[1]
    d_out = params["w2"].shape[1]
    out_dtype = x.dtype
    mxu_dtype = params["w1"].dtype

    x_bytes = jnp.dtype(x.dtype).itemsize
    w_bytes = jnp.dtype(mxu_dtype).itemsize
    o_bytes = jnp.dtype(out_dtype).itemsize
    ln_bytes = (jnp.dtype(params["ln_gamma"].dtype).itemsize
                if use_layernorm else 0)
    n_w1 = 2 if is_gated else 1

    H0 = _round_up(d_hidden, 128)
    O_p = _round_up(d_out, 128)          # lane-dense output stores

    # --- VMEM budget clamped to the actual per-core capacity
    #     (64 MiB/TC on v7x, 128 MiB on v5e/v6e).
    try:
        vmem_cap = int(pltpu.get_tpu_info().vmem_capacity_bytes)
    except Exception:
        vmem_cap = 64 * 2 ** 20          # conservative fallback (v7x-safe)
    budget = int(0.80 * vmem_cap)        # headroom for compiler internals

    def vmem_bytes(tm_, tk_):
        H_p_ = _round_up(d_hidden, tk_)
        num_k_ = H_p_ // tk_
        needs_xn_ = (use_layernorm or x.dtype != mxu_dtype) and num_k_ > 1
        use_acc_ = num_k_ > 1 and out_dtype != jnp.float32
        b = 2 * tm_ * d_in * x_bytes                     # x tile (double-buffered)
        b += 2 * d_in * tk_ * w_bytes * n_w1             # w1 / w_v tiles
        b += 2 * tk_ * O_p * w_bytes                     # w2 tile
        b += 2 * (tk_ * n_w1 + O_p) * w_bytes            # bias tiles
        b += 2 * 2 * d_in * ln_bytes                     # ln params
        b += 2 * tm_ * O_p * o_bytes                     # output tile
        if needs_xn_:
            b += tm_ * d_in * w_bytes
        if use_acc_:
            b += tm_ * O_p * 4
        return b

    # --- Row tile: big enough for weight-streaming arithmetic intensity, but
    #     always >= 2 row tiles (when N allows) so the "parallel" axis can shard
    #     across v7x's two TensorCores / megacore.
    tm = min(tile_rows, _round_up(N, 8))
    if N > 8 and _round_up(N, tm) // tm < 2:
        tm = _round_up((N + 1) // 2, 8)

    # --- Hidden tile: keep all weights resident (single reduction step, weights
    #     streamed from HBM exactly once) whenever they comfortably fit in VMEM;
    #     otherwise tile the hidden axis (default 1024 -> fewer/fatter k steps)
    #     and shrink tk then tm until the budget is met.
    if tile_hidden is None:
        tk = H0 if vmem_bytes(tm, H0) <= int(0.55 * budget) else min(1024, H0)
    else:
        tk = min(_round_up(tile_hidden, 128), H0)
    while vmem_bytes(tm, tk) > budget and tk > 256:
        tk = max(256, _round_up(tk // 2, 128))
    while vmem_bytes(tm, tk) > budget and tm > 64:
        tm = max(8, _round_up(tm // 2, 8))

    N_p = _round_up(N, tm)
    H_p = _round_up(d_hidden, tk)
    num_k = H_p // tk
    needs_xn = (use_layernorm or x.dtype != mxu_dtype) and num_k > 1
    use_acc = num_k > 1 and out_dtype != jnp.float32

    # Zero padding of rows / hidden / out columns contributes exactly zero.
    # _pad2 early-outs for already-aligned params, so pre-padding once at load
    # time removes this traffic from the per-call path entirely.
    x_p = _pad2(x, N_p, d_in)
    w1 = _pad2(params["w1"], d_in, H_p)
    b1 = _pad2(params["b1"], 1, H_p)
    w2 = _pad2(params["w2"], H_p, O_p)
    b2 = _pad2(params["b2"], 1, O_p)

    operands = [x_p]
    in_specs = [pl.BlockSpec((tm, d_in), lambda i, k: (i, 0))]   # resident over k
    if use_layernorm:
        operands += [params["ln_gamma"].reshape(1, d_in),
                     params["ln_beta"].reshape(1, d_in)]
        in_specs += [pl.BlockSpec((1, d_in), lambda i, k: (0, 0)),
                     pl.BlockSpec((1, d_in), lambda i, k: (0, 0))]
    operands += [w1, b1]
    in_specs += [pl.BlockSpec((d_in, tk), lambda i, k: (0, k)),
                 pl.BlockSpec((1, tk), lambda i, k: (0, k))]
    if is_gated:
        operands += [_pad2(params["w_v"], d_in, H_p),
                     _pad2(params["b_v"], 1, H_p)]
        in_specs += [pl.BlockSpec((d_in, tk), lambda i, k: (0, k)),
                     pl.BlockSpec((1, tk), lambda i, k: (0, k))]
    operands += [w2, b2]
    in_specs += [pl.BlockSpec((tk, O_p), lambda i, k: (k, 0)),
                 pl.BlockSpec((1, O_p), lambda i, k: (0, 0))]
    out_spec = pl.BlockSpec((tm, O_p), lambda i, k: (i, 0))

    scratch_shapes = []
    if needs_xn:
        scratch_shapes.append(pltpu.VMEM((tm, d_in), mxu_dtype))
    if use_acc:
        scratch_shapes.append(pltpu.VMEM((tm, O_p), jnp.float32))

    vmem_limit = int(min(0.9 * vmem_cap,
                         max(32 * 2 ** 20, 1.35 * vmem_bytes(tm, tk))))

    # Truthful cost estimate: weights are re-streamed once per row tile unless
    # the hidden axis collapsed to a single resident step.
    n_row_tiles = N_p // tm
    w_restream = n_row_tiles if num_k > 1 else 1
    weight_bytes = (d_in * H_p * n_w1 + H_p * O_p
                    + H_p * n_w1 + O_p) * w_bytes
    flops = 2 * N_p * d_in * H_p * n_w1 + 2 * N_p * H_p * O_p
    bytes_accessed = (N_p * d_in * x_bytes + weight_bytes * w_restream
                      + 2 * d_in * ln_bytes + N_p * O_p * o_bytes)
    cost = pl.CostEstimate(flops=int(flops),
                           transcendentals=int(N_p) if use_layernorm else 0,
                           bytes_accessed=int(bytes_accessed))

    kernel = functools.partial(_ff_kernel, is_gated=is_gated,
                               use_layernorm=use_layernorm, eps=eps,
                               mxu_dtype=mxu_dtype, needs_xn=needs_xn,
                               use_acc=use_acc, num_k=num_k)

    out_p = pl.pallas_call(
        kernel,
        out_shape=jax.ShapeDtypeStruct((N_p, O_p), out_dtype),
        grid_spec=pltpu.PrefetchScalarGridSpec(
            num_scalar_prefetch=0,
            grid=(n_row_tiles, num_k),
            in_specs=in_specs,
            out_specs=out_spec,
            scratch_shapes=scratch_shapes),
        compiler_params=pltpu.CompilerParams(
            dimension_semantics=("parallel", "arbitrary"),
            vmem_limit_bytes=vmem_limit),
        cost_estimate=cost,
    )(*operands)
    return out_p[:N, :d_out]


def _ref_forward(x, params, *, is_gated, use_layernorm, eps=1e-5):
    """Pure-JAX reference mirroring the PyTorch forward (eval mode), f32 math."""
    f32 = jnp.float32
    xf = x.astype(f32)
    if use_layernorm:
        mean = jnp.mean(xf, axis=-1, keepdims=True)
        var = jnp.mean((xf - mean) ** 2, axis=-1, keepdims=True)
        xf = (xf - mean) / jnp.sqrt(var + eps)
        xf = xf * params["ln_gamma"].astype(f32) + params["ln_beta"].astype(f32)
    g = jnp.maximum(xf @ params["w1"].astype(f32) + params["b1"].astype(f32), 0.0)
    if is_gated:
        g = g * (xf @ params["w_v"].astype(f32) + params["b_v"].astype(f32))
    return (g @ params["w2"].astype(f32) + params["b2"].astype(f32)).astype(x.dtype)


def _make_params(key, d_in, d_hidden, d_out, *, is_gated, use_layernorm,
                 dtype=jnp.float32):
    ks = jax.random.split(key, 6)
    s1 = 1.0 / float(jnp.sqrt(d_in))
    s2 = 1.0 / float(jnp.sqrt(d_hidden))
    u = lambda k, shape, s: jax.random.uniform(k, shape, jnp.float32, -s, s).astype(dtype)
    params = {
        "w1": u(ks[0], (d_in, d_hidden), s1),
        "b1": u(ks[1], (1, d_hidden), s1),
        "w2": u(ks[2], (d_hidden, d_out), s2),
        "b2": u(ks[3], (1, d_out), s2),
    }
    if is_gated:
        params["w_v"] = u(ks[4], (d_in, d_hidden), s1)
        params["b_v"] = u(ks[5], (1, d_hidden), s1)
    if use_layernorm:
        params["ln_gamma"] = jnp.ones((1, d_in), dtype)
        params["ln_beta"] = jnp.zeros((1, d_in), dtype)
    return params


if __name__ == "__main__":
    batch, seq = 2, 8
    d_in, d_hidden, d_out = 128, 256, 128

    key = jax.random.PRNGKey(0)
    kx, kp1, kp2, kp3 = jax.random.split(key, 4)

    x3d = jax.random.normal(kx, (batch, seq, d_in), jnp.float32)
    x = x3d.reshape(batch * seq, d_in)  # (N, d_in) token stream

    # 1) Default config (is_gated=False, use_layernorm=False), f32.
    #    Weights fully resident (single hidden step), no scratch buffers at all.
    params = _make_params(kp1, d_in, d_hidden, d_out,
                          is_gated=False, use_layernorm=False)
    out = jax.block_until_ready(
        feed_forward(x, params, is_gated=False, use_layernorm=False))
    ref = _ref_forward(x, params, is_gated=False, use_layernorm=False)
    assert out.shape == (batch * seq, d_out)
    assert jnp.allclose(out, ref, atol=1e-5, rtol=1e-5), "plain path mismatch"

    # 2) Gated + LayerNorm with un-aligned d_out and ragged row count:
    #    exercises zero-padding (rows + lanes), the multi-step hidden reduction
    #    (tile_hidden=128 -> 2 accumulation steps), the xn scratch, and the
    #    f32 accumulate-directly-into-output path.
    d_out_odd = 96
    n_ragged = batch * seq - 3
    params_g = _make_params(kp2, d_in, d_hidden, d_out_odd,
                            is_gated=True, use_layernorm=True)
    x_r = x[:n_ragged]
    out_g = jax.block_until_ready(
        feed_forward(x_r, params_g, is_gated=True, use_layernorm=True,
                     tile_hidden=128))
    ref_g = _ref_forward(x_r, params_g, is_gated=True, use_layernorm=True)
    assert out_g.shape == (n_ragged, d_out_odd)
    assert jnp.allclose(out_g, ref_g, atol=1e-4, rtol=1e-4), "gated path mismatch"

    # 3) bf16 activations + weights fed straight to the MXU (f32 accumulate),
    #    multi-step hidden reduction with the f32 acc scratch (bf16 output).
    params_b = _make_params(kp3, d_in, d_hidden, d_out,
                            is_gated=True, use_layernorm=False,
                            dtype=jnp.bfloat16)
    x_b = x.astype(jnp.bfloat16)
    out_b = jax.block_until_ready(
        feed_forward(x_b, params_b, is_gated=True, use_layernorm=False,
                     tile_hidden=128))
    ref_b = _ref_forward(x_b, params_b, is_gated=True, use_layernorm=False)
    err = jnp.max(jnp.abs(out_b.astype(jnp.float32) - ref_b.astype(jnp.float32)))
    assert float(err) < 0.1, f"bf16 path mismatch (max abs err {float(err)})"

    print("KERNEL_OK")
</pallas_src>

<mosaic_0001>
module attributes {stable_mosaic.version = 11 : i64} {
  func.func @_ff_kernel(%arg0: i32, %arg1: i32, %arg2: memref<8x128xf32, #tpu.memory_space<vmem>>, %arg3: memref<128x256xf32, #tpu.memory_space<vmem>>, %arg4: memref<1x256xf32, #tpu.memory_space<vmem>>, %arg5: memref<256x128xf32, #tpu.memory_space<vmem>>, %arg6: memref<1x128xf32, #tpu.memory_space<vmem>>, %arg7: memref<8x128xf32, #tpu.memory_space<vmem>>) attributes {dimension_semantics = [#tpu.dimension_semantics<parallel>, #tpu.dimension_semantics<arbitrary>], iteration_bounds = array<i64: 2, 1>, scalar_prefetch = 0 : i64, scratch_operands = 0 : i64, tpu.core_type = #tpu.core_type<tc>, window_params = [{transform_indices = @transform_0, window_bounds = array<i64: 8, 128>}, {transform_indices = @transform_1, window_bounds = array<i64: 128, 256>}, {transform_indices = @transform_2, window_bounds = array<i64: 1, 256>}, {transform_indices = @transform_3, window_bounds = array<i64: 256, 128>}, {pipeline_mode = #tpu.pipeline_mode<synchronous>, transform_indices = @transform_4, window_bounds = array<i64: 1, 128>}, {transform_indices = @transform_5, window_bounds = array<i64: 8, 128>}]} {
    %c0 = arith.constant 0 : index
    %c0_0 = arith.constant 0 : index
    %0 = vector.load %arg2[%c0, %c0_0] : memref<8x128xf32, #tpu.memory_space<vmem>>, vector<8x128xf32>
    %c0_1 = arith.constant 0 : index
    %c0_2 = arith.constant 0 : index
    %1 = vector.load %arg3[%c0_1, %c0_2] : memref<128x256xf32, #tpu.memory_space<vmem>>, vector<128x256xf32>
    %cst = arith.constant dense<0.000000e+00> : vector<8x256xf32>
    %2 = tpu.matmul %0, %1, %cst {dimension_numbers = #tpu.dot_dimension_numbers<[1], [0], [0], [1], [0, 0, 1, 1], [], []>} : vector<8x128xf32>, vector<128x256xf32>, vector<8x256xf32> -> vector<8x256xf32>
    %c0_3 = arith.constant 0 : index
    %c0_4 = arith.constant 0 : index
    %3 = vector.load %arg4[%c0_3, %c0_4] : memref<1x256xf32, #tpu.memory_space<vmem>>, vector<1x256xf32>
    %4 = vector.broadcast %3 : vector<1x256xf32> to vector<8x256xf32>
    %5 = arith.addf %2, %4 : vector<8x256xf32>
    %cst_5 = arith.constant 0.000000e+00 : f32
    %6 = vector.broadcast %cst_5 : f32 to vector<8x256xf32>
    %7 = arith.maximumf %5, %6 : vector<8x256xf32>
    %c0_6 = arith.constant 0 : index
    %c0_7 = arith.constant 0 : index
    %8 = vector.load %arg5[%c0_6, %c0_7] : memref<256x128xf32, #tpu.memory_space<vmem>>, vector<256x128xf32>
    %cst_8 = arith.constant dense<0.000000e+00> : vector<8x128xf32>
    %9 = tpu.matmul %7, %8, %cst_8 {dimension_numbers = #tpu.dot_dimension_numbers<[1], [0], [0], [1], [0, 0, 1, 1], [], []>} : vector<8x256xf32>, vector<256x128xf32>, vector<8x128xf32> -> vector<8x128xf32>
    %c0_9 = arith.constant 0 : index
    %c0_10 = arith.constant 0 : index
    %10 = vector.load %arg6[%c0_9, %c0_10] : memref<1x128xf32, #tpu.memory_space<vmem>>, vector<1x128xf32>
    %11 = vector.broadcast %10 : vector<1x128xf32> to vector<8x128xf32>
    %12 = arith.addf %9, %11 : vector<8x128xf32>
    %c0_11 = arith.constant 0 : index
    %c0_12 = arith.constant 0 : index
    %13 = vector.load %arg7[%c0_11, %c0_12] : memref<8x128xf32, #tpu.memory_space<vmem>>, vector<8x128xf32>
    tpu.vector_store %arg7[%c0_11, %c0_12], %12 {strides = array<i32>} : memref<8x128xf32, #tpu.memory_space<vmem>>, vector<8x128xf32>,
    return
  }
  func.func @transform_0(%arg0: i32, %arg1: i32) -> (i32, i32) {
    %c0_i32 = arith.constant 0 : i32
    %c0_i32_0 = arith.constant 0 : i32
    return %arg0, %c0_i32 : i32, i32
  }
  func.func @transform_1(%arg0: i32, %arg1: i32) -> (i32, i32) {
    %c0_i32 = arith.constant 0 : i32
    %c0_i32_0 = arith.constant 0 : i32
    return %c0_i32, %arg1 : i32, i32
  }
  func.func @transform_2(%arg0: i32, %arg1: i32) -> (i32, i32) {
    %c0_i32 = arith.constant 0 : i32
    %c0_i32_0 = arith.constant 0 : i32
    return %c0_i32, %arg1 : i32, i32
  }
  func.func @transform_3(%arg0: i32, %arg1: i32) -> (i32, i32) {
    %c0_i32 = arith.constant 0 : i32
    %c0_i32_0 = arith.constant 0 : i32
    return %arg1, %c0_i32 : i32, i32
  }
  func.func @transform_4(%arg0: i32, %arg1: i32) -> (i32, i32) {
    %c0_i32 = arith.constant 0 : i32
    %c0_i32_0 = arith.constant 0 : i32
    %c0_i32_1 = arith.constant 0 : i32
    return %c0_i32, %c0_i32_0 : i32, i32
  }
  func.func @transform_5(%arg0: i32, %arg1: i32) -> (i32, i32) {
    %c0_i32 = arith.constant 0 : i32
    %c0_i32_0 = arith.constant 0 : i32
    return %arg0, %c0_i32 : i32, i32
  }
}

</mosaic_0001>

<llo_original>
// kernel: tpu_custom_call.1
$region0: #{tpu_custom_call.1}
  #allocation0 [shape = 'u32[]', space=smem, size = 0x4, offset = 0x4, fixed_abs, tag = 'smem constant byte address 0x4 - core index']
  #allocation1 [shape = 'u32[144,128]{1,0:T(1,128)}', space=vmem, size = 0x12000, scoped, tag = 'internal scratch']
  %s0 = inlined_call_operand.hbm [shape: f32[16,128], index: 0, kind: input, shape index: {}]
  %s1 = inlined_call_operand.hbm [shape: f32[128,256], index: 1, kind: input, shape index: {}]
  %s2 = inlined_call_operand.vmem [shape: f32[1,256], index: 2, kind: input, shape index: {}]
  %s3 = inlined_call_operand.hbm [shape: f32[256,128], index: 3, kind: input, shape index: {}]
  %s4 = inlined_call_operand.vmem [shape: f32[1,128], index: 4, kind: input, shape index: {}]
  %s5 = inlined_call_operand.hbm [shape: f32[16,128], index: 5, kind: output, shape index: {}]
  %s6 = sld [smem:[#allocation0]]
  $region65: #{tpu_custom_call.1} parent=0
    _
  %s8 = ssub.s32 1, %s6
  %s9 = scalar_select 0, %s8, %s6
  $region1: #{tpu_custom_call.1} parent=0
    #allocation2 [shape = 'u8[8192]{0}', space=vmem, size = 0x2000, scoped, tag = 'input window, operand 0']
    #allocation3 [shape = 's32[2]{0}', space=sflag, size = 0x8, scoped, tag = 'scoped memory for tpu_custom_call.1']
    #allocation4 [shape = 's32[2]{0}', space=sflag, size = 0x8, scoped, tag = 'scoped memory for tpu_custom_call.1']
    #allocation5 [shape = 'u8[131072]{0}', space=vmem, size = 0x20000, scoped, tag = 'input window, operand 1, single buffered']
    #allocation6 [shape = 's32[1]{0}', space=sflag, size = 0x4, scoped, tag = 'scoped memory for tpu_custom_call.1']
    #allocation7 [shape = 'u8[131072]{0}', space=vmem, size = 0x20000, scoped, tag = 'input window, operand 3, single buffered']
    #allocation8 [shape = 'u8[8192]{0}', space=vmem, size = 0x2000, scoped, tag = 'output window, operand 0']
    %10 = vsyncpa [#allocation3], 0
    %s11 = scalar_lea.sflag [#allocation3], 1
    %12 = vsyncpa %s11, 0
    %13 = vsyncpa [#allocation6], 0
    %14 = vsyncpa [#allocation4], 0
    %s15 = scalar_lea.sflag [#allocation4], 1
    %16 = vsyncpa %s15, 0
    loop: start=0, step=1, limit=4
    $region2: #{tpu_custom_call.1} parent=1 // loop_pre_header
      _
    $region3: #{tpu_custom_call.1} parent=1 // loop_header
      %s18 = sphi 0, %s22
      %p19 = scmp.ge.s32.totalorder %s18, 4
      %s25 = sphi 0, %s37
      %s26 = sphi 0, %s33
      %s27 = sphi 0, %s25
      %s28 = sphi 0, %s26
      %s29 = sphi 0, %s27
      %s30 = sphi 0, %s28
      %s40 = sphi 0, %s42
      %s43 = sphi 0, %s40
      %s44 = sphi 0, %s43
      %s60 = sphi 0, %s44
      %s66 = sphi 0, %s68
      %s69 = sphi 0, %s66
      %s70 = sphi 0, %s69
      %s86 = sphi 0, %s70
      %s92 = sphi 0, %s94
      %s95 = sphi 0, %s92
      %s96 = sphi 0, %s95
      %s112 = sphi 0, %s96
      %s118 = sphi 0, %s120
      %s121 = sphi 0, %s118
      %s122 = sphi 0, %s121
      %s138 = sphi 0, %s122
      %s142 = sphi 0, %s142
      %s144 = sphi 0, %s142
      %s145 = sphi 0, %s144
      %s159 = sphi 0, %s145
      %s165 = sphi 0, %s167
      %s168 = sphi 0, %s165
      %s169 = sphi 0, %s168
      %s185 = sphi 0, %s169
    $region4: #{tpu_custom_call.1} parent=1 // loop_header_branch
      %21 = sbr.rel (%p19) target = $region8
    $region5: #{tpu_custom_call.1} parent=1 // loop_body
      %s23 = ssub.s32 %s18, 1
      %s24 = ssub.s32 %s18, 2
      %s31 = sadd.s32 1, %s26
      %p32 = scmp.ge.s32.totalorder %s31, 1
      %s33 = scalar_select %p32, 0, %s31
      %s34 = sadd.s32 1, %s25
      %s35 = scalar_select %p32, %s34, %s25
      %p36 = scmp.ge.s32.totalorder %s35, 2
      %s37 = scalar_select %p36, 0, %s35
      %s38 = ssub.s32 %s25, %s37
      %p39 = scmp.eq.s32.totalorder %s38, 0
      %s41 = sadd.s32 %s40, 1
      %s42 = scalar_select %p39, %s40, %s41
      %p45 = pneg %p39
      %p46 = scmp.eq.s32.totalorder %s18, 1
      %p47 = por %p45, %p46
      %p48 = scmp.ne.s32.totalorder %s40, %s43
      %p49 = scmp.eq.s32.totalorder %s18, 0
      %p50 = por %p48, %p49
      %p51 = scmp.ne.s32.totalorder %s40, %s43
      %p52 = scmp.eq.s32.totalorder %s23, 1
      %p53 = por %p51, %p52
      %p54 = scmp.ne.s32.totalorder %s43, %s44
      %p55 = scmp.eq.s32.totalorder %s23, 0
      %p56 = por %p54, %p55
      %p57 = scmp.ne.s32.totalorder %s43, %s44
      %p58 = scmp.eq.s32.totalorder %s24, 1
      %p59 = por %p57, %p58
      %p61 = scmp.ne.s32.totalorder %s44, %s60
      %p62 = scmp.eq.s32.totalorder %s24, 0
      %p63 = por %p61, %p62
      %s64 = ssub.s32 %s26, %s33
      %p65 = scmp.eq.s32.totalorder %s64, 0
      %s67 = sadd.s32 %s66, 1
      %s68 = scalar_select %p65, %s66, %s67
      %p71 = pneg %p65
      %p72 = scmp.eq.s32.totalorder %s18, 1
      %p73 = por %p71, %p72
      %p74 = scmp.ne.s32.totalorder %s66, %s69
      %p75 = scmp.eq.s32.totalorder %s18, 0
      %p76 = por %p74, %p75
      %p77 = scmp.ne.s32.totalorder %s66, %s69
      %p78 = scmp.eq.s32.totalorder %s23, 1
      %p79 = por %p77, %p78
      %p80 = scmp.ne.s32.totalorder %s69, %s70
      %p81 = scmp.eq.s32.totalorder %s23, 0
      %p82 = por %p80, %p81
      %p83 = scmp.ne.s32.totalorder %s69, %s70
      %p84 = scmp.eq.s32.totalorder %s24, 1
      %p85 = por %p83, %p84
      %p87 = scmp.ne.s32.totalorder %s70, %s86
      %p88 = scmp.eq.s32.totalorder %s24, 0
      %p89 = por %p87, %p88
      %s90 = ssub.s32 %s26, %s33
      %p91 = scmp.eq.s32.totalorder %s90, 0
      %s93 = sadd.s32 %s92, 1
      %s94 = scalar_select %p91, %s92, %s93
      %p97 = pneg %p91
      %p98 = scmp.eq.s32.totalorder %s18, 1
      %p99 = por %p97, %p98
      %p100 = scmp.ne.s32.totalorder %s92, %s95
      %p101 = scmp.eq.s32.totalorder %s18, 0
      %p102 = por %p100, %p101
      %p103 = scmp.ne.s32.totalorder %s92, %s95
      %p104 = scmp.eq.s32.totalorder %s23, 1
      %p105 = por %p103, %p104
      %p106 = scmp.ne.s32.totalorder %s95, %s96
      %p107 = scmp.eq.s32.totalorder %s23, 0
      %p108 = por %p106, %p107
      %p109 = scmp.ne.s32.totalorder %s95, %s96
      %p110 = scmp.eq.s32.totalorder %s24, 1
      %p111 = por %p109, %p110
      %p113 = scmp.ne.s32.totalorder %s96, %s112
      %p114 = scmp.eq.s32.totalorder %s24, 0
      %p115 = por %p113, %p114
      %s116 = ssub.s32 %s26, %s33
      %p117 = scmp.eq.s32.totalorder %s116, 0
      %s119 = sadd.s32 %s118, 1
      %s120 = scalar_select %p117, %s118, %s119
      %p123 = pneg %p117
      %p124 = scmp.eq.s32.totalorder %s18, 1
      %p125 = por %p123, %p124
      %p126 = scmp.ne.s32.totalorder %s118, %s121
      %p127 = scmp.eq.s32.totalorder %s18, 0
      %p128 = por %p126, %p127
      %p129 = scmp.ne.s32.totalorder %s118, %s121
      %p130 = scmp.eq.s32.totalorder %s23, 1
      %p131 = por %p129, %p130
      %p132 = scmp.ne.s32.totalorder %s121, %s122
      %p133 = scmp.eq.s32.totalorder %s23, 0
      %p134 = por %p132, %p133
      %p135 = scmp.ne.s32.totalorder %s121, %s122
      %p136 = scmp.eq.s32.totalorder %s24, 1
      %p137 = por %p135, %p136
      %p139 = scmp.ne.s32.totalorder %s122, %s138
      %p140 = scmp.eq.s32.totalorder %s24, 0
      %p141 = por %p139, %p140
      %s143 = sadd.s32 %s142, 1
      %p146 = scmp.eq.s32.totalorder %s18, 1
      %p147 = scmp.ne.s32.totalorder %s142, %s144
      %p148 = scmp.eq.s32.totalorder %s18, 0
      %p149 = por %p147, %p148
      %p150 = scmp.ne.s32.totalorder %s142, %s144
      %p151 = scmp.eq.s32.totalorder %s23, 1
      %p152 = por %p150, %p151
      %p153 = scmp.ne.s32.totalorder %s144, %s145
      %p154 = scmp.eq.s32.totalorder %s23, 0
      %p155 = por %p153, %p154
      %p156 = scmp.ne.s32.totalorder %s144, %s145
      %p157 = scmp.eq.s32.totalorder %s24, 1
      %p158 = por %p156, %p157
      %p160 = scmp.ne.s32.totalorder %s145, %s159
      %p161 = scmp.eq.s32.totalorder %s24, 0
      %p162 = por %p160, %p161
      %s163 = ssub.s32 %s25, %s37
      %p164 = scmp.eq.s32.totalorder %s163, 0
      %s166 = sadd.s32 %s165, 1
      %s167 = scalar_select %p164, %s165, %s166
      %p170 = pneg %p164
      %p171 = scmp.eq.s32.totalorder %s18, 1
      %p172 = por %p170, %p171
      %p173 = scmp.ne.s32.totalorder %s165, %s168
      %p174 = scmp.eq.s32.totalorder %s18, 0
      %p175 = por %p173, %p174
      %p176 = scmp.ne.s32.totalorder %s165, %s168
      %p177 = scmp.eq.s32.totalorder %s23, 1
      %p178 = por %p176, %p177
      %p179 = scmp.ne.s32.totalorder %s168, %s169
      %p180 = scmp.eq.s32.totalorder %s23, 0
      %p181 = por %p179, %p180
      %p182 = scmp.ne.s32.totalorder %s168, %s169
      %p183 = scmp.eq.s32.totalorder %s24, 1
      %p184 = por %p182, %p183
      %p186 = scmp.ne.s32.totalorder %s169, %s185
      %p187 = scmp.eq.s32.totalorder %s24, 0
      %p188 = por %p186, %p187
      %p189 = scmp.le.s32.totalorder 1, %s18
      %p190 = scmp.lt.s32.totalorder %s18, 3
      %p191 = pnand %p189, %p190
      %p192 = pneg %p191
      // Predicated region
      $region9: #{tpu_custom_call.1} parent=5 // pred_check
        _
      $region10: #{tpu_custom_call.1} parent=5 // pred_check_branch
        %194 = sbr.rel (%p191) target = $region12
      $region11: #{tpu_custom_call.1} parent=5 // pred_region
        %s195 = ssub.s32 %s18, 1
        // Predicated region
        $region13: #{tpu_custom_call.1} parent=11 // pred_check
          %p196 = pneg %p82
        $region14: #{tpu_custom_call.1} parent=11 // pred_check_branch
          %198 = sbr.rel (%p196) target = $region16
        $region15: #{tpu_custom_call.1} parent=11 // pred_region
          %s199 = smul.u32 2, %s28
          %s201 = ssub.s32 4096, 4096
          %202 = vsyncadd [#allocation6], %s201
          %s203 = smul.addr %s199, 128
          %s204 = scalar_lea.hbm %s1, %s203
          %s205 = sshll.u32 [#allocation5], 4
          %s206 = int_to_ptr.vmem [resolvable:$true] %s205
          %211 = dma.hbm_to_vmem [thread:$0]  %s204, 4096, %s206, [#allocation6], 256, 256, 16
        $region16: #{tpu_custom_call.1} parent=11 // pred_fallthru
          _
        // Predicated region
        $region17: #{tpu_custom_call.1} parent=11 // pred_check
          %p212 = pneg %p108
        $region18: #{tpu_custom_call.1} parent=11 // pred_check_branch
          %214 = sbr.rel (%p212) target = $region20
        $region19: #{tpu_custom_call.1} parent=11 // pred_region
          %s215 = smul.u32 2, %s28
          %p216 = scmp.lt.s32.totalorder %s215, 1
          %s217 = scalar_select %p216, %s215, 1
          %s218 = scalar_lea.vmem %s2, %s217
          %s219 = smul.u32 2, %s28
        $region20: #{tpu_custom_call.1} parent=11 // pred_fallthru
          _
        // Predicated region
        $region21: #{tpu_custom_call.1} parent=11 // pred_check
          %p220 = pneg %p134
        $region22: #{tpu_custom_call.1} parent=11 // pred_check_branch
          %222 = sbr.rel (%p220) target = $region24
        $region23: #{tpu_custom_call.1} parent=11 // pred_region
          %s223 = smul.u32 32, %s28
          %s225 = ssub.s32 4096, 4096
          %226 = vsyncadd [#allocation6], %s225
          %s227 = smul.addr %s223, 128
          %s228 = scalar_lea.hbm %s3, %s227
          %s229 = sshll.u32 [#allocation7], 4
          %s230 = int_to_ptr.vmem [resolvable:$true] %s229
          %235 = dma.hbm_to_vmem [thread:$0]  %s228, 4096, %s230, [#allocation6], 128, 128, 8
        $region24: #{tpu_custom_call.1} parent=11 // pred_fallthru
          _
        // Predicated region
        $region25: #{tpu_custom_call.1} parent=11 // pred_check
          %p236 = pneg %p155
        $region26: #{tpu_custom_call.1} parent=11 // pred_check_branch
          %238 = sbr.rel (%p236) target = $region28
        $region27: #{tpu_custom_call.1} parent=11 // pred_region
          _
        $region28: #{tpu_custom_call.1} parent=11 // pred_fallthru
          _
      $region12: #{tpu_custom_call.1} parent=5 // pred_fallthru
        _
      %p239 = scmp.lt.s32.totalorder %s18, 2
      // Predicated region
      $region29: #{tpu_custom_call.1} parent=5 // pred_check
        %p240 = pneg %p239
      $region30: #{tpu_custom_call.1} parent=5 // pred_check_branch
        %242 = sbr.rel (%p240) target = $region32
      $region31: #{tpu_custom_call.1} parent=5 // pred_region
        // Predicated region
        $region33: #{tpu_custom_call.1} parent=31 // pred_check
          %p243 = pneg %p50
        $region34: #{tpu_custom_call.1} parent=31 // pred_check_branch
          %245 = sbr.rel (%p243) target = $region36
        $region35: #{tpu_custom_call.1} parent=31 // pred_region
          %s246 = sand.u32 %s40, 1
          %s247 = scalar_lea.sflag [#allocation3], %s246
          %s248 = sand.u32 %s40, 1
          %s249 = smul.addr %s248, 8
          %s250 = scalar_lea.vmem [#allocation2], %s249
          %s252 = ssub.s32 128, 128
          %253 = vsyncadd %s247, %s252
          %s254 = smul.addr %s25, 128
          %s255 = scalar_lea.hbm %s0, %s254
          %s257 = sshll.u32 %s250, 4
          %s258 = int_to_ptr.vmem [resolvable:$true] %s257
          %260 = dma.hbm_to_vmem [thread:$0]  %s255, 128, %s258, %s247
        $region36: #{tpu_custom_call.1} parent=31 // pred_fallthru
          _
      $region32: #{tpu_custom_call.1} parent=5 // pred_fallthru
        _
      %p261 = scmp.le.s32.totalorder 1, %s18
      %p262 = scmp.lt.s32.totalorder %s18, 3
      %p263 = pnand %p261, %p262
      %p264 = pneg %p263
      // Predicated region
      $region37: #{tpu_custom_call.1} parent=5 // pred_check
        _
      $region38: #{tpu_custom_call.1} parent=5 // pred_check_branch
        %266 = sbr.rel (%p263) target = $region40
      $region39: #{tpu_custom_call.1} parent=5 // pred_region
        %s267 = ssub.s32 %s18, 1
        %s268 = sand.u32 %s43, 1
        %s269 = scalar_lea.sflag [#allocation3], %s268
        %s270 = sand.u32 %s43, 1
        %s271 = smul.addr %s270, 8
        %s272 = scalar_lea.vmem [#allocation2], %s271
        // Predicated region
        $region41: #{tpu_custom_call.1} parent=39 // pred_check
          %p273 = pneg %p56
        $region42: #{tpu_custom_call.1} parent=39 // pred_check_branch
          %275 = sbr.rel (%p273) target = $region44
        $region43: #{tpu_custom_call.1} parent=39 // pred_region
          %276 = dma.done %s269, 128
        $region44: #{tpu_custom_call.1} parent=39 // pred_fallthru
          _
        // Predicated region
        $region45: #{tpu_custom_call.1} parent=39 // pred_check
          %p277 = pneg %p82
        $region46: #{tpu_custom_call.1} parent=39 // pred_check_branch
          %279 = sbr.rel (%p277) target = $region48
        $region47: #{tpu_custom_call.1} parent=39 // pred_region
          %280 = dma.done [#allocation6], 4096
        $region48: #{tpu_custom_call.1} parent=39 // pred_fallthru
          _
        // Predicated region
        $region49: #{tpu_custom_call.1} parent=39 // pred_check
          %p281 = pneg %p134
        $region50: #{tpu_custom_call.1} parent=39 // pred_check_branch
          %283 = sbr.rel (%p281) target = $region52
        $region51: #{tpu_custom_call.1} parent=39 // pred_region
          %284 = dma.done [#allocation6], 4096
        $region52: #{tpu_custom_call.1} parent=39 // pred_fallthru
          _
        %s285 = sand.u32 %s43, 1
        %s286 = scalar_lea.sflag [#allocation3], %s285
        %s287 = sand.u32 %s43, 1
        %s288 = smul.addr %s287, 8
        %s289 = scalar_lea.vmem [#allocation2], %s288
        %p290 = pneg %p56
        %p291 = pneg %p53
        %p292 = pneg %p82
        %p293 = pneg %p79
        %s294 = smul.u32 2, %s28
        %p295 = scmp.lt.s32.totalorder %s294, 1
        %s296 = scalar_select %p295, %s294, 1
        %s297 = scalar_lea.vmem %s2, %s296
        %p298 = pneg %p108
        %p299 = pneg %p105
        %p300 = pneg %p134
        %p301 = pneg %p131
        %p302 = pneg %p155
        %p303 = pneg %p152
        %p304 = pneg %p181
        %p305 = pneg %p178
        %s306 = sand.u32 %s168, 1
        %s307 = scalar_lea.sflag [#allocation4], %s306
        %s308 = sand.u32 %s168, 1
        %s309 = smul.addr %s308, 8
        %s310 = scalar_lea.vmem [#allocation8], %s309
        %s311 = smul.u32 2, %s28
        %s312 = smul.u32 2, %s28
        %p313 = scmp.lt.s32.totalorder %s312, 1
        %s314 = scalar_select %p313, %s312, 1
        %s315 = scalar_lea.vmem %s2, %s314
        %s316 = smul.u32 2, %s28
        %s317 = smul.u32 32, %s28
        %v318 = vld [vmem:[%s272] sm:$0xff]
        %v319 = vld [vmem:[#allocation5] sm:$0xff]
        %v320 = vld [vmem:[#allocation5 + $0x8] sm:$0xff]
        %v321 = vld [vmem:[#allocation5 + $0x10] sm:$0xff]
        %v322 = vld [vmem:[#allocation5 + $0x18] sm:$0xff]
        %v323 = vld [vmem:[#allocation5 + $0x20] sm:$0xff]
        %v324 = vld [vmem:[#allocation5 + $0x28] sm:$0xff]
        %v325 = vld [vmem:[#allocation5 + $0x30] sm:$0xff]
        %v326 = vld [vmem:[#allocation5 + $0x38] sm:$0xff]
        %v327 = vld [vmem:[#allocation5 + $0x40] sm:$0xff]
        %v328 = vld [vmem:[#allocation5 + $0x48] sm:$0xff]
        %v329 = vld [vmem:[#allocation5 + $0x50] sm:$0xff]
        %v330 = vld [vmem:[#allocation5 + $0x58] sm:$0xff]
        %v331 = vld [vmem:[#allocation5 + $0x60] sm:$0xff]
        %v332 = vld [vmem:[#allocation5 + $0x68] sm:$0xff]
        %v333 = vld [vmem:[#allocation5 + $0x70] sm:$0xff]
        %v334 = vld [vmem:[#allocation5 + $0x78] sm:$0xff]
        %v335 = vld [vmem:[#allocation5 + $0x80] sm:$0xff]
        %v336 = vld [vmem:[#allocation5 + $0x88] sm:$0xff]
        %v337 = vld [vmem:[#allocation5 + $0x90] sm:$0xff]
        %v338 = vld [vmem:[#allocation5 + $0x98] sm:$0xff]
        %v339 = vld [vmem:[#allocation5 + $0xa0] sm:$0xff]
        %v340 = vld [vmem:[#allocation5 + $0xa8] sm:$0xff]
        %v341 = vld [vmem:[#allocation5 + $0xb0] sm:$0xff]
        %v342 = vld [vmem:[#allocation5 + $0xb8] sm:$0xff]
        %v343 = vld [vmem:[#allocation5 + $0xc0] sm:$0xff]
        %v344 = vld [vmem:[#allocation5 + $0xc8] sm:$0xff]
        %v345 = vld [vmem:[#allocation5 + $0xd0] sm:$0xff]
        %v346 = vld [vmem:[#allocation5 + $0xd8] sm:$0xff]
        %v347 = vld [vmem:[#allocation5 + $0xe0] sm:$0xff]
        %v348 = vld [vmem:[#allocation5 + $0xe8] sm:$0xff]
        %v349 = vld [vmem:[#allocation5 + $0xf0] sm:$0xff]
        %v350 = vld [vmem:[#allocation5 + $0xf8] sm:$0xff]
        %v351 = vld [vmem:[%s315] sm:$0x3]
        %v353 = vlaneseq
        %v354 = vshrl.u32 %v353, 7
        %v355 = vsub.s32 0, %v354
        %v356 = vrot.slane %v351, %v355
        %v357 = vlaneseq
        %v358 = vshrl.u32 %v357, 7
        %v359 = vsub.s32 1, %v358
        %v360 = vrot.slane %v351, %v359
        %363 = vmatprep.subr.mxu0 %v320
        %364 = vmatpush1.msra.mxu0 %v319
        %365 = vmatprep.subr.mxu0 %v322
        %366 = vmatpush1.msra.mxu0 %v321
        %367 = vmatprep.subr.mxu0 %v324
        %368 = vmatpush1.msra.mxu0 %v323
        %369 = vmatprep.subr.mxu0 %v326
        %370 = vmatpush1.msra.mxu0 %v325
        %371 = vmatprep.subr.mxu0 %v328
        %372 = vmatpush1.msra.mxu0 %v327
        %373 = vmatprep.subr.mxu0 %v330
        %374 = vmatpush1.msra.mxu0 %v329
        %375 = vmatprep.subr.mxu0 %v332
        %376 = vmatpush1.msra.mxu0 %v331
        %377 = vmatprep.subr.mxu0 %v334
        %378 = vmatpush1.msra.mxu0 %v333
        %379 = vmatprep.subr.mxu0 %v336
        %380 = vmatpush1.msra.mxu0 %v335
        %381 = vmatprep.subr.mxu0 %v338
        %382 = vmatpush1.msra.mxu0 %v337
        %383 = vmatprep.subr.mxu0 %v340
        %384 = vmatpush1.msra.mxu0 %v339
        %385 = vmatprep.subr.mxu0 %v342
        %386 = vmatpush1.msra.mxu0 %v341
        %387 = vmatprep.subr.mxu0 %v344
        %388 = vmatpush1.msra.mxu0 %v343
        %389 = vmatprep.subr.mxu0 %v346
        %390 = vmatpush1.msra.mxu0 %v345
        %391 = vmatprep.subr.mxu0 %v348
        %392 = vmatpush1.msra.mxu0 %v347
        %393 = vmatprep.subr.mxu0 %v350
        %394 = vmatpush1.msra.mxu0 %v349
        %395 = vmatprep.subr.mxu0 0.0
        %396 = vmatpush1.msra.mxu0 0.0
        %397 = vmatprep.subr.mxu0 0.0
        %398 = vmatpush1.msra.mxu0 0.0
        %399 = vmatprep.subr.mxu0 0.0
        %400 = vmatpush1.msra.mxu0 0.0
        %401 = vmatprep.subr.mxu0 0.0
        %402 = vmatpush1.msra.mxu0 0.0
        %403 = vmatprep.subr.mxu0 0.0
        %404 = vmatpush1.msra.mxu0 0.0
        %405 = vmatprep.subr.mxu0 0.0
        %406 = vmatpush1.msra.mxu0 0.0
        %407 = vmatprep.subr.mxu0 0.0
        %408 = vmatpush1.msra.mxu0 0.0
        %409 = vmatprep.subr.mxu0 0.0
        %410 = vmatpush1.msra.mxu0 0.0
        %411 = vmatprep.subr.mxu0 0.0
        %412 = vmatpush1.msra.mxu0 0.0
        %413 = vmatprep.subr.mxu0 0.0
        %414 = vmatpush1.msra.mxu0 0.0
        %415 = vmatprep.subr.mxu0 0.0
        %416 = vmatpush1.msra.mxu0 0.0
        %417 = vmatprep.subr.mxu0 0.0
        %418 = vmatpush1.msra.mxu0 0.0
        %419 = vmatprep.subr.mxu0 0.0
        %420 = vmatpush1.msra.mxu0 0.0
        %421 = vmatprep.subr.mxu0 0.0
        %422 = vmatpush1.msra.mxu0 0.0
        %423 = vmatprep.subr.mxu0 0.0
        %424 = vmatpush1.msra.mxu0 0.0
        %425 = vmatprep.subr.mxu0 0.0
        %426 = vmatpush1.msra.mxu0 0.0
        %427 = vmatprep.mubr.f32.mxu0 0.0
        %428 = vmatmul.mubr.f32.gmra.mrb[0].mxu0 %v318
        %v429 = vpop.f32.mrb[0].mxu0
        %v430 = vadd.f32 %v356, %v429
        %v431 = vpop.f32.mrb[0].mxu0
        %v432 = vadd.f32 %v360, %v431
        %433 = vdwg.mxu0
        %v434 = vmax.f32 %v430, 0.0
        %v435 = vmax.f32 %v432, 0.0
        %v436 = vld [vmem:[#allocation7] sm:$0xff]
        %v437 = vld [vmem:[#allocation7 + $0x8] sm:$0xff]
        %v438 = vld [vmem:[#allocation7 + $0x10] sm:$0xff]
        %v439 = vld [vmem:[#allocation7 + $0x18] sm:$0xff]
        %v440 = vld [vmem:[#allocation7 + $0x20] sm:$0xff]
        %v441 = vld [vmem:[#allocation7 + $0x28] sm:$0xff]
        %v442 = vld [vmem:[#allocation7 + $0x30] sm:$0xff]
        %v443 = vld [vmem:[#allocation7 + $0x38] sm:$0xff]
        %v444 = vld [vmem:[#allocation7 + $0x40] sm:$0xff]
        %v445 = vld [vmem:[#allocation7 + $0x48] sm:$0xff]
        %v446 = vld [vmem:[#allocation7 + $0x50] sm:$0xff]
        %v447 = vld [vmem:[#allocation7 + $0x58] sm:$0xff]
        %v448 = vld [vmem:[#allocation7 + $0x60] sm:$0xff]
        %v449 = vld [vmem:[#allocation7 + $0x68] sm:$0xff]
        %v450 = vld [vmem:[#allocation7 + $0x70] sm:$0xff]
        %v451 = vld [vmem:[#allocation7 + $0x78] sm:$0xff]
        %v452 = vld [vmem:[#allocation7 + $0x80] sm:$0xff]
        %v453 = vld [vmem:[#allocation7 + $0x88] sm:$0xff]
        %v454 = vld [vmem:[#allocation7 + $0x90] sm:$0xff]
        %v455 = vld [vmem:[#allocation7 + $0x98] sm:$0xff]
        %v456 = vld [vmem:[#allocation7 + $0xa0] sm:$0xff]
        %v457 = vld [vmem:[#allocation7 + $0xa8] sm:$0xff]
        %v458 = vld [vmem:[#allocation7 + $0xb0] sm:$0xff]
        %v459 = vld [vmem:[#allocation7 + $0xb8] sm:$0xff]
        %v460 = vld [vmem:[#allocation7 + $0xc0] sm:$0xff]
        %v461 = vld [vmem:[#allocation7 + $0xc8] sm:$0xff]
        %v462 = vld [vmem:[#allocation7 + $0xd0] sm:$0xff]
        %v463 = vld [vmem:[#allocation7 + $0xd8] sm:$0xff]
        %v464 = vld [vmem:[#allocation7 + $0xe0] sm:$0xff]
        %v465 = vld [vmem:[#allocation7 + $0xe8] sm:$0xff]
        %v466 = vld [vmem:[#allocation7 + $0xf0] sm:$0xff]
        %v467 = vld [vmem:[#allocation7 + $0xf8] sm:$0xff]
        %v468 = vld [vmem:[%s4] sm:$0x1]
        %v470 = vlaneseq
        %v471 = vshrl.u32 %v470, 7
        %v472 = vsub.s32 0, %v471
        %v473 = vrot.slane %v468, %v472
        %475 = vmatprep.subr.mxu0 0.0
        %476 = vmatpush1.msra.mxu0 %v436
        %477 = vmatprep.subr.mxu0 0.0
        %478 = vmatpush1.msra.mxu0 %v437
        %479 = vmatprep.subr.mxu0 0.0
        %480 = vmatpush1.msra.mxu0 %v438
        %481 = vmatprep.subr.mxu0 0.0
        %482 = vmatpush1.msra.mxu0 %v439
        %483 = vmatprep.subr.mxu0 0.0
        %484 = vmatpush1.msra.mxu0 %v440
        %485 = vmatprep.subr.mxu0 0.0
        %486 = vmatpush1.msra.mxu0 %v441
        %487 = vmatprep.subr.mxu0 0.0
        %488 = vmatpush1.msra.mxu0 %v442
        %489 = vmatprep.subr.mxu0 0.0
        %490 = vmatpush1.msra.mxu0 %v443
        %491 = vmatprep.subr.mxu0 0.0
        %492 = vmatpush1.msra.mxu0 %v444
        %493 = vmatprep.subr.mxu0 0.0
        %494 = vmatpush1.msra.mxu0 %v445
        %495 = vmatprep.subr.mxu0 0.0
        %496 = vmatpush1.msra.mxu0 %v446
        %497 = vmatprep.subr.mxu0 0.0
        %498 = vmatpush1.msra.mxu0 %v447
        %499 = vmatprep.subr.mxu0 0.0
        %500 = vmatpush1.msra.mxu0 %v448
        %501 = vmatprep.subr.mxu0 0.0
        %502 = vmatpush1.msra.mxu0 %v449
        %503 = vmatprep.subr.mxu0 0.0
        %504 = vmatpush1.msra.mxu0 %v450
        %505 = vmatprep.subr.mxu0 0.0
        %506 = vmatpush1.msra.mxu0 %v451
        %507 = vmatprep.subr.mxu0 0.0
        %508 = vmatpush1.msra.mxu0 %v452
        %509 = vmatprep.subr.mxu0 0.0
        %510 = vmatpush1.msra.mxu0 %v453
        %511 = vmatprep.subr.mxu0 0.0
        %512 = vmatpush1.msra.mxu0 %v454
        %513 = vmatprep.subr.mxu0 0.0
        %514 = vmatpush1.msra.mxu0 %v455
        %515 = vmatprep.subr.mxu0 0.0
        %516 = vmatpush1.msra.mxu0 %v456
        %517 = vmatprep.subr.mxu0 0.0
        %518 = vmatpush1.msra.mxu0 %v457
        %519 = vmatprep.subr.mxu0 0.0
        %520 = vmatpush1.msra.mxu0 %v458
        %521 = vmatprep.subr.mxu0 0.0
        %522 = vmatpush1.msra.mxu0 %v459
        %523 = vmatprep.subr.mxu0 0.0
        %524 = vmatpush1.msra.mxu0 %v460
        %525 = vmatprep.subr.mxu0 0.0
        %526 = vmatpush1.msra.mxu0 %v461
        %527 = vmatprep.subr.mxu0 0.0
        %528 = vmatpush1.msra.mxu0 %v462
        %529 = vmatprep.subr.mxu0 0.0
        %530 = vmatpush1.msra.mxu0 %v463
        %531 = vmatprep.subr.mxu0 0.0
        %532 = vmatpush1.msra.mxu0 %v464
        %533 = vmatprep.subr.mxu0 0.0
        %534 = vmatpush1.msra.mxu0 %v465
        %535 = vmatprep.subr.mxu0 0.0
        %536 = vmatpush1.msra.mxu0 %v466
        %537 = vmatprep.subr.mxu0 0.0
        %538 = vmatpush1.msra.mxu0 %v467
        %539 = vmatprep.mubr.f32.mxu0 %v435
        %540 = vmatmul.mubr.f32.gmra.mrb[0].mxu0 %v434
        %v541 = vpop.f32.mrb[0].mxu0
        %v542 = vadd.f32 %v473, %v541
        %v543 = vpop.f32.mrb[0].mxu0
        %544 = vdwg.mxu0
        %545 = vst [vmem:[%s310] sm:$0xff] %v542
        %s546 = sand.u32 %s168, 1
        %s547 = scalar_lea.sflag [#allocation4], %s546
        %s548 = sand.u32 %s168, 1
        %s549 = smul.addr %s548, 8
        %s550 = scalar_lea.vmem [#allocation8], %s549
        // Predicated region
        $region53: #{tpu_custom_call.1} parent=39 // pred_check
          %p551 = pneg %p178
        $region54: #{tpu_custom_call.1} parent=39 // pred_check_branch
          %553 = sbr.rel (%p551) target = $region56
        $region55: #{tpu_custom_call.1} parent=39 // pred_region
          %s555 = ssub.s32 128, 128
          %556 = vsyncadd %s547, %s555
          %s557 = smul.addr %s27, 128
          %s558 = scalar_lea.hbm %s5, %s557
          %s560 = sshll.u32 %s550, 4
          %s561 = int_to_ptr.vmem [resolvable:$true] %s560
          %563 = dma.vmem_to_hbm [thread:$0]  %s561, 128, %s558, %s547
        $region56: #{tpu_custom_call.1} parent=39 // pred_fallthru
          _
      $region40: #{tpu_custom_call.1} parent=5 // pred_fallthru
        _
      %p564 = scmp.le.s32.totalorder 2, %s18
      // Predicated region
      $region57: #{tpu_custom_call.1} parent=5 // pred_check
        %p565 = pneg %p564
      $region58: #{tpu_custom_call.1} parent=5 // pred_check_branch
        %567 = sbr.rel (%p565) target = $region60
      $region59: #{tpu_custom_call.1} parent=5 // pred_region
        %s568 = ssub.s32 %s18, 2
        // Predicated region
        $region61: #{tpu_custom_call.1} parent=59 // pred_check
          %p569 = pneg %p184
        $region62: #{tpu_custom_call.1} parent=59 // pred_check_branch
          %571 = sbr.rel (%p569) target = $region64
        $region63: #{tpu_custom_call.1} parent=59 // pred_region
          %s572 = sand.u32 %s169, 1
          %s573 = scalar_lea.sflag [#allocation4], %s572
          %s574 = sand.u32 %s169, 1
          %s575 = smul.addr %s574, 8
          %s576 = scalar_lea.vmem [#allocation8], %s575
          %577 = dma.done %s573, 128
        $region64: #{tpu_custom_call.1} parent=59 // pred_fallthru
          _
      $region60: #{tpu_custom_call.1} parent=5 // pred_fallthru
        _
    $region6: #{tpu_custom_call.1} parent=1 // loop_footer
      %s22 = sadd.s32 1, %s18
    $region7: #{tpu_custom_call.1} parent=1 // loop_footer_branch
      %17 = sbr.rel target = $region3
    $region8: #{tpu_custom_call.1} parent=1 // loop_exit
      _
    %578 = vsyncpa [#allocation3], 1
    %s579 = scalar_lea.sflag [#allocation3], 1
    %580 = vsyncpa %s579, 1
    %581 = vsyncpa [#allocation6], 1
    %582 = vsyncpa [#allocation4], 1
    %s583 = scalar_lea.sflag [#allocation4], 1
    %584 = vsyncpa %s583, 1

</llo_original>
